<compile_context>
chip_gen: v7x
topology: tpu7x:2x2x1
jax: 0.10.0
libtpu: 0.0.40
codegen_flags: <defaults>
</compile_context>

<pallas_src>
import functools

import jax
import jax.numpy as jnp
from jax import lax
from jax.experimental import pallas as pl
from jax.experimental.pallas import tpu as pltpu


_VMEM_LIMIT = 48 * 1024 * 1024   # leave headroom on v7x (64 MiB physical VMEM)


def _round_up(x, m):
    return ((x + m - 1) // m) * m


def _cdiv(a, b):
    return (a + b - 1) // b


# ----------------------------------------------------------------------------
# Guided attention loss kernel
# ----------------------------------------------------------------------------
def _ga_loss_kernel(ilens_ref, olens_ref, att_ref, out_ref, *,
                    bt, to_tile, b_valid, neg_inv_two_sigma_sq, elemwise_acc):
    b_blk = pl.program_id(0)
    to_blk = pl.program_id(1)

    tile_shape = (att_ref.shape[1], att_ref.shape[2])       # (to_tile, T_in)
    row0 = (to_blk * to_tile).astype(jnp.float32)
    # iotas generated once per kernel body (hoisted out of the batch loop)
    gx = lax.broadcasted_iota(jnp.float32, tile_shape, 0) + row0   # decoder idx
    gy = lax.broadcasted_iota(jnp.float32, tile_shape, 1)          # encoder idx

    def item_masked(i):
        g = b_blk * bt + i
        il = ilens_ref[g].astype(jnp.float32)
        ol = olens_ref[g].astype(jnp.float32)
        # scalar reciprocals -> only VPU multiplies per element (exp stays EUP)
        inv_il = 1.0 / il
        inv_ol = 1.0 / ol
        att = att_ref[i].astype(jnp.float32)                 # (to_tile, T_in)
        diff = gy * inv_il - gx * inv_ol
        ga = 1.0 - jnp.exp(diff * diff * neg_inv_two_sigma_sq)
        # g < b_valid masks ragged final batch blocks (att rows are garbage);
        # gx/gy bounds mask the ragged T_out block and the sequence padding.
        valid = (gx < ol) & (gy < il) & (g < b_valid)
        return jnp.where(valid, ga * att, 0.0)

    if bt == 1:
        total = jnp.sum(item_masked(0))
    elif elemwise_acc:
        # Element-wise accumulator: one cross-lane reduce after the loop
        # instead of an XLU reduce feeding a scalar carry every iteration.
        acc = lax.fori_loop(0, bt, lambda i, a: a + item_masked(i),
                            jnp.zeros(tile_shape, jnp.float32),
                            unroll=min(bt, 4))
        total = jnp.sum(acc)
    else:
        total = lax.fori_loop(0, bt, lambda i, a: a + jnp.sum(item_masked(i)),
                              jnp.float32(0.0), unroll=min(bt, 4))
    out_ref[...] = jnp.reshape(total, (1, 1, 1, 1))


def guided_attention_loss(att_ws, ilens, olens, sigma=0.4,
                          target_block_bytes=4 << 20):
    """att_ws: (B, T_out, T_in) float (f32/bf16); ilens/olens: (B,) ints >=1."""
    B, T_out, T_in = att_ws.shape
    ilens = ilens.astype(jnp.int32)
    olens = olens.astype(jnp.int32)

    # Analytic denominator: number of valid (t_out < olen, t_in < ilen) cells.
    denom = jnp.sum(ilens.astype(jnp.float32) * olens.astype(jnp.float32))

    itemsize = jnp.dtype(att_ws.dtype).itemsize
    sub = max(8, 32 // itemsize)                 # sublane multiple for dtype
    # VMEM footprint estimate of one (layout-padded) attention map.
    row_bytes = _round_up(T_in, 128) * itemsize
    item_bytes = _round_up(T_out, sub) * row_bytes

    if item_bytes >= target_block_bytes:
        # Long utterances: one batch item per step; tile T_out so the
        # double-buffered block stays small (matters on v7x's 64 MiB VMEM).
        bt = 1
        if T_out <= sub:
            to_tile = T_out                      # full extent
        else:
            units_cap = max(1, int(target_block_bytes // row_bytes) // sub)
            to_tile = sub * max(1, min(units_cap, T_out // sub))
    else:
        # Small maps: group batch items per grid step to amortize the
        # ~0.35us/step overhead, but keep >= 2 batch blocks so v7x's two
        # TensorCores both get work.
        bt = int(max(1, min(B, target_block_bytes // max(1, item_bytes))))
        bt = max(1, min(bt, (B + 1) // 2))
        to_tile = T_out                          # full extent

    num_b_blocks = _cdiv(B, bt)
    num_to_blocks = _cdiv(T_out, to_tile)

    # Only the tiny length vectors are padded (keeps the in-kernel SMEM reads
    # of a ragged final batch block in bounds, length 1 avoids div-by-zero);
    # the attention tensor itself is passed unpadded and un-cast.
    b_pad = num_b_blocks * bt
    ilens_p = jnp.pad(ilens, (0, b_pad - B), constant_values=1)
    olens_p = jnp.pad(olens, (0, b_pad - B), constant_values=1)

    elemwise_acc = (to_tile * T_in) <= 16384     # acc tile <= 64 KiB of f32

    kernel = functools.partial(
        _ga_loss_kernel, bt=bt, to_tile=to_tile, b_valid=B,
        neg_inv_two_sigma_sq=-1.0 / (2.0 * float(sigma) * float(sigma)),
        elemwise_acc=elemwise_acc)

    partials = pl.pallas_call(
        kernel,
        out_shape=jax.ShapeDtypeStruct(
            (num_b_blocks, num_to_blocks, 1, 1), jnp.float32),
        grid_spec=pltpu.PrefetchScalarGridSpec(
            num_scalar_prefetch=2,
            grid=(num_b_blocks, num_to_blocks),
            in_specs=[pl.BlockSpec((bt, to_tile, T_in),
                                   lambda b, t, il, ol: (b, t, 0))],
            out_specs=pl.BlockSpec((1, 1, 1, 1),
                                   lambda b, t, il, ol: (b, t, 0, 0)),
        ),
        compiler_params=pltpu.CompilerParams(
            dimension_semantics=("parallel", "parallel"),
            vmem_limit_bytes=_VMEM_LIMIT),
    )(ilens_p, olens_p, att_ws)

    return jnp.sum(partials) / denom


# ----------------------------------------------------------------------------
# Fused masked mel MSE + masked gate BCE kernel (shared time mask / T grid)
# ----------------------------------------------------------------------------
def _mel_gate_kernel(lens3_ref, lens2_ref, pre_ref, post_ref, tgt_ref,
                     gate_x_ref, gate_y_ref, mse_out_ref, bce_out_ref,
                     *, t_tile, pos_weight):
    col0 = pl.program_id(0) * t_tile

    # --- masked mel MSE (pre-net + post-net share target & mask) -------------
    pre = pre_ref[...].astype(jnp.float32)          # (B, n_mel, t_tile)
    post = post_ref[...].astype(jnp.float32)
    tgt = tgt_ref[...].astype(jnp.float32)
    t_idx3 = lax.broadcasted_iota(jnp.int32, pre.shape, 2) + col0
    mask3 = t_idx3 < lens3_ref[...]                 # (B,1,1) broadcast
    d1 = pre - tgt
    d2 = post - tgt
    mse_out_ref[...] = jnp.reshape(
        jnp.sum(jnp.where(mask3, d1 * d1 + d2 * d2, 0.0)), (1, 1, 1))

    # --- masked BCE-with-logits on the stop gate (rides in VPU/EUP slack) ----
    x = gate_x_ref[...].astype(jnp.float32)         # (B, t_tile)
    y = gate_y_ref[...].astype(jnp.float32)
    t_idx2 = lax.broadcasted_iota(jnp.int32, x.shape, 1) + col0
    mask2 = t_idx2 < lens2_ref[...]                 # (B,1) broadcast
    # stable softplus(-x) = max(-x, 0) + log(1 + exp(-|x|))
    sp = jnp.maximum(-x, 0.0) + jnp.log(1.0 + jnp.exp(-jnp.abs(x)))
    if pos_weight is None:
        per = (1.0 - y) * x + sp
    else:
        per = (1.0 - y) * x + (1.0 + (float(pos_weight) - 1.0) * y) * sp
    bce_out_ref[...] = jnp.reshape(
        jnp.sum(jnp.where(mask2, per, 0.0)), (1, 1, 1))


def masked_mel_and_gate_loss(mel_out, mel_post, mel_target, gate_out,
                             gate_target, mel_lengths, pos_weight=None,
                             target_block_bytes=4 << 20):
    B, n_mel, T = mel_out.shape
    mel_lengths = mel_lengths.astype(jnp.int32)
    total_frames = jnp.sum(mel_lengths).astype(jnp.float32)
    mse_denom = jnp.float32(n_mel) * total_frames
    gate_denom = total_frames

    itemsize = jnp.dtype(mel_out.dtype).itemsize
    col_bytes = B * n_mel * itemsize                # one time-column, one tensor
    if T <= 128:
        t_tile = T                                  # full extent
    else:
        n128 = T // 128
        cap_units = max(1, int(target_block_bytes // max(1, col_bytes)) // 128)
        tile_units = max(1, min(n128, cap_units))
        if n128 >= 2:                               # >=2 T-blocks for v7x megacore
            tile_units = min(tile_units, (n128 + 1) // 2)
        t_tile = 128 * tile_units
    num_t_blocks = _cdiv(T, t_tile)

    lens3 = mel_lengths.reshape(B, 1, 1)
    lens2 = mel_lengths.reshape(B, 1)

    kernel = functools.partial(_mel_gate_kernel, t_tile=t_tile,
                               pos_weight=pos_weight)
    mse_p, bce_p = pl.pallas_call(
        kernel,
        out_shape=(jax.ShapeDtypeStruct((num_t_blocks, 1, 1), jnp.float32),
                   jax.ShapeDtypeStruct((num_t_blocks, 1, 1), jnp.float32)),
        grid=(num_t_blocks,),
        in_specs=[
            pl.BlockSpec((B, 1, 1), lambda t: (0, 0, 0)),
            pl.BlockSpec((B, 1), lambda t: (0, 0)),
            pl.BlockSpec((B, n_mel, t_tile), lambda t: (0, 0, t)),
            pl.BlockSpec((B, n_mel, t_tile), lambda t: (0, 0, t)),
            pl.BlockSpec((B, n_mel, t_tile), lambda t: (0, 0, t)),
            pl.BlockSpec((B, t_tile), lambda t: (0, t)),
            pl.BlockSpec((B, t_tile), lambda t: (0, t)),
        ],
        out_specs=(pl.BlockSpec((1, 1, 1), lambda t: (t, 0, 0)),
                   pl.BlockSpec((1, 1, 1), lambda t: (t, 0, 0))),
        compiler_params=pltpu.CompilerParams(
            dimension_semantics=("parallel",),
            vmem_limit_bytes=_VMEM_LIMIT),
    )(lens3, lens2, mel_out, mel_post, mel_target, gate_out, gate_target)

    return jnp.sum(mse_p) / mse_denom, jnp.sum(bce_p) / gate_denom


# ----------------------------------------------------------------------------
# Tacotron2Loss forward (s_prob / e_prob = None path)
# ----------------------------------------------------------------------------
def tacotron2_loss(mel_out, mel_out_postnet, gate_out, alignments,
                   mel_target, gate_target, input_lengths, mel_lengths,
                   *, guided_sigma=0.4, n_frames_per_step=1, pos_weight=None):
    mse_loss, gate_loss = masked_mel_and_gate_loss(
        mel_out, mel_out_postnet, mel_target, gate_out, gate_target,
        mel_lengths, pos_weight=pos_weight)
    if guided_sigma > 0:
        olens = jnp.ceil(mel_lengths.astype(jnp.float32)
                         / float(n_frames_per_step)).astype(jnp.int32)
        align_loss = guided_attention_loss(alignments, input_lengths, olens,
                                           sigma=guided_sigma)
    else:
        align_loss = 0.0
    # TODO(synk): speaker / expressive encoder losses (categorical entropy,
    # VAE KL, GMVAE gaussian) and the update_lambda iteration schedule are
    # tiny host-side scalar logic only active when s_prob/e_prob are given;
    # the None path (contributing 0.0) is kept here. l1_loss is never
    # computed in the original forward and stays 0.0.
    return mse_loss + gate_loss + align_loss


# ----------------------------------------------------------------------------
# Pure-JAX references (replicate the PyTorch forward)
# ----------------------------------------------------------------------------
def _ref_guided_attention(att_ws, ilens, olens, sigma):
    B, T_out, T_in = att_ws.shape
    out_idx = jnp.arange(T_out, dtype=jnp.float32)[None, :, None]
    in_idx = jnp.arange(T_in, dtype=jnp.float32)[None, None, :]
    il = ilens.astype(jnp.float32)[:, None, None]
    ol = olens.astype(jnp.float32)[:, None, None]
    ga = 1.0 - jnp.exp(-((in_idx / il - out_idx / ol) ** 2)
                       / (2.0 * sigma * sigma))
    valid = (out_idx < ol) & (in_idx < il)
    losses = jnp.where(valid, ga, 0.0) * att_ws.astype(jnp.float32)
    return (jnp.sum(jnp.where(valid, losses, 0.0))
            / jnp.sum(valid.astype(jnp.float32)))


def _reference_loss(mel_out, mel_post, gate_out, align, mel_target, gate_target,
                    in_lens, mel_lens, *, sigma, n_frames_per_step, pos_weight):
    B, n_mel, T = mel_out.shape
    t_idx = jnp.arange(T)[None, :]
    tmask = t_idx < mel_lens[:, None]
    mmask = jnp.broadcast_to(tmask[:, None, :], mel_out.shape)
    cnt = jnp.sum(mmask.astype(jnp.float32))
    mse = (jnp.sum(jnp.where(mmask, (mel_out - mel_target) ** 2, 0.0))
           + jnp.sum(jnp.where(mmask, (mel_post - mel_target) ** 2, 0.0))) / cnt
    x, y = gate_out, gate_target
    sp = jnp.maximum(-x, 0.0) + jnp.log(1.0 + jnp.exp(-jnp.abs(x)))
    if pos_weight is None:
        per = (1.0 - y) * x + sp
    else:
        per = (1.0 - y) * x + (1.0 + (pos_weight - 1.0) * y) * sp
    gate = (jnp.sum(jnp.where(tmask, per, 0.0))
            / jnp.sum(tmask.astype(jnp.float32)))
    olens = jnp.ceil(mel_lens.astype(jnp.float32)
                     / float(n_frames_per_step)).astype(jnp.int32)
    ga = _ref_guided_attention(align, in_lens, olens, sigma)
    return mse + gate + ga


def _make_case(key, B, n_mel, T_dec, T_enc, mel_lengths, input_lengths):
    k = jax.random.split(key, 5)
    mel_target = jax.random.normal(k[0], (B, n_mel, T_dec), dtype=jnp.float32)
    mel_out = mel_target + 0.1 * jax.random.normal(
        k[1], (B, n_mel, T_dec), dtype=jnp.float32)
    mel_out_postnet = mel_target + 0.05 * jax.random.normal(
        k[2], (B, n_mel, T_dec), dtype=jnp.float32)
    gate_out = jax.random.normal(k[3], (B, T_dec), dtype=jnp.float32)
    gate_target = (jnp.arange(T_dec)[None, :]
                   >= (mel_lengths - 1)[:, None]).astype(jnp.float32)
    align = jax.random.uniform(k[4], (B, T_dec, T_enc), dtype=jnp.float32)
    align = align / jnp.sum(align, axis=-1, keepdims=True)
    return (mel_out, mel_out_postnet, gate_out, align, mel_target, gate_target,
            input_lengths, mel_lengths)


if __name__ == "__main__":
    key = jax.random.PRNGKey(0)
    sigma = 0.4
    n_frames_per_step = 1

    # Case 1: tiny shapes, single-block paths everywhere.
    mel_lengths = jnp.array([16, 11], dtype=jnp.int32)
    input_lengths = jnp.array([8, 5], dtype=jnp.int32)
    args1 = _make_case(jax.random.fold_in(key, 1), 2, 8, 16, 8,
                       mel_lengths, input_lengths)
    loss1 = jax.block_until_ready(
        tacotron2_loss(*args1, guided_sigma=sigma,
                       n_frames_per_step=n_frames_per_step))
    ref1 = _reference_loss(*args1, sigma=sigma,
                           n_frames_per_step=n_frames_per_step, pos_weight=None)
    assert jnp.allclose(loss1, ref1, rtol=1e-4, atol=1e-5), (loss1, ref1)

    # Case 2: T > 128 exercises multi-block T grid + ragged final time block
    # in the fused mel/gate kernel; non-128-multiple T_in for the GA kernel.
    mel_lengths2 = jnp.array([200, 137], dtype=jnp.int32)
    input_lengths2 = jnp.array([24, 17], dtype=jnp.int32)
    args2 = _make_case(jax.random.fold_in(key, 2), 2, 8, 200, 24,
                       mel_lengths2, input_lengths2)
    loss2 = jax.block_until_ready(
        tacotron2_loss(*args2, guided_sigma=sigma,
                       n_frames_per_step=n_frames_per_step))
    ref2 = _reference_loss(*args2, sigma=sigma,
                           n_frames_per_step=n_frames_per_step, pos_weight=None)
    assert jnp.allclose(loss2, ref2, rtol=1e-4, atol=1e-5), (loss2, ref2)

    # Extra checks of the guided-attention tiling paths (T_out tiling with
    # bt=1; batch grouping with a ragged batch block; bf16 inputs).
    kga = jax.random.fold_in(key, 3)
    B2, To2, Ti2 = 3, 40, 20
    att2 = jax.random.uniform(kga, (B2, To2, Ti2), dtype=jnp.float32)
    il2 = jnp.array([20, 13, 7], dtype=jnp.int32)
    ol2 = jnp.array([40, 29, 18], dtype=jnp.int32)
    ga_ref2 = _ref_guided_attention(att2, il2, ol2, sigma)
    ga_tiled = jax.block_until_ready(
        guided_attention_loss(att2, il2, ol2, sigma=sigma,
                              target_block_bytes=4096))      # bt=1, T_out tiled
    assert jnp.allclose(ga_tiled, ga_ref2, rtol=1e-4, atol=1e-5), (ga_tiled,
                                                                   ga_ref2)
    ga_grouped = jax.block_until_ready(
        guided_attention_loss(att2, il2, ol2, sigma=sigma,
                              target_block_bytes=45000))     # bt=2, ragged batch
    assert jnp.allclose(ga_grouped, ga_ref2, rtol=1e-4, atol=1e-5), (ga_grouped,
                                                                     ga_ref2)
    att2_bf16 = att2.astype(jnp.bfloat16)
    ga_ref_bf = _ref_guided_attention(att2_bf16, il2, ol2, sigma)
    ga_bf = jax.block_until_ready(
        guided_attention_loss(att2_bf16, il2, ol2, sigma=sigma))  # bf16 stream
    assert jnp.allclose(ga_bf, ga_ref_bf, rtol=1e-3, atol=1e-5), (ga_bf,
                                                                  ga_ref_bf)

    print("KERNEL_OK")
</pallas_src>

<mosaic_0001>
module attributes {stable_mosaic.version = 11 : i64} {
  func.func @_mel_gate_kernel(%arg0: i32, %arg1: memref<2x1x1xi32, #tpu.memory_space<vmem>>, %arg2: memref<2x1xi32, #tpu.memory_space<vmem>>, %arg3: memref<2x8x16xf32, #tpu.memory_space<vmem>>, %arg4: memref<2x8x16xf32, #tpu.memory_space<vmem>>, %arg5: memref<2x8x16xf32, #tpu.memory_space<vmem>>, %arg6: memref<2x16xf32, #tpu.memory_space<vmem>>, %arg7: memref<2x16xf32, #tpu.memory_space<vmem>>, %arg8: memref<1x1x1xf32, #tpu.memory_space<vmem>>, %arg9: memref<1x1x1xf32, #tpu.memory_space<vmem>>) attributes {dimension_semantics = [#tpu.dimension_semantics<parallel>], iteration_bounds = array<i64: 1>, scalar_prefetch = 0 : i64, scratch_operands = 0 : i64, tpu.core_type = #tpu.core_type<tc>, window_params = [{pipeline_mode = #tpu.pipeline_mode<synchronous>, transform_indices = @transform_0, window_bounds = array<i64: 2, 1, 1>}, {pipeline_mode = #tpu.pipeline_mode<synchronous>, transform_indices = @transform_1, window_bounds = array<i64: 2, 1>}, {transform_indices = @transform_2, window_bounds = array<i64: 2, 8, 16>}, {transform_indices = @transform_3, window_bounds = array<i64: 2, 8, 16>}, {transform_indices = @transform_4, window_bounds = array<i64: 2, 8, 16>}, {transform_indices = @transform_5, window_bounds = array<i64: 2, 16>}, {transform_indices = @transform_6, window_bounds = array<i64: 2, 16>}, {transform_indices = @transform_7, window_bounds = array<i64: 1, 1, 1>}, {transform_indices = @transform_8, window_bounds = array<i64: 1, 1, 1>}]} {
    %c16_i32 = arith.constant 16 : i32
    %0 = arith.muli %arg0, %c16_i32 : i32
    %c0 = arith.constant 0 : index
    %c0_0 = arith.constant 0 : index
    %c0_1 = arith.constant 0 : index
    %1 = vector.load %arg3[%c0, %c0_0, %c0_1] : memref<2x8x16xf32, #tpu.memory_space<vmem>>, vector<2x8x16xf32>
    %c0_2 = arith.constant 0 : index
    %c0_3 = arith.constant 0 : index
    %c0_4 = arith.constant 0 : index
    %2 = vector.load %arg4[%c0_2, %c0_3, %c0_4] : memref<2x8x16xf32, #tpu.memory_space<vmem>>, vector<2x8x16xf32>
    %c0_5 = arith.constant 0 : index
    %c0_6 = arith.constant 0 : index
    %c0_7 = arith.constant 0 : index
    %3 = vector.load %arg5[%c0_5, %c0_6, %c0_7] : memref<2x8x16xf32, #tpu.memory_space<vmem>>, vector<2x8x16xf32>
    %4 = tpu.iota {dimensions = array<i32: 2>} : vector<2x8x16xi32>
    %5 = vector.broadcast %0 : i32 to vector<2x8x16xi32>
    %6 = arith.addi %4, %5 : vector<2x8x16xi32>
    %c0_8 = arith.constant 0 : index
    %c0_9 = arith.constant 0 : index
    %c0_10 = arith.constant 0 : index
    %7 = vector.load %arg1[%c0_8, %c0_9, %c0_10] : memref<2x1x1xi32, #tpu.memory_space<vmem>>, vector<2x1x1xi32>
    %8 = vector.broadcast %7 : vector<2x1x1xi32> to vector<2x8x16xi32>
    %9 = arith.cmpi slt, %6, %8 : vector<2x8x16xi32>
    %10 = arith.subf %1, %3 : vector<2x8x16xf32>
    %11 = arith.subf %2, %3 : vector<2x8x16xf32>
    %12 = arith.mulf %10, %10 : vector<2x8x16xf32>
    %13 = arith.mulf %11, %11 : vector<2x8x16xf32>
    %14 = arith.addf %12, %13 : vector<2x8x16xf32>
    %cst = arith.constant 0.000000e+00 : f32
    %15 = vector.broadcast %cst : f32 to vector<2x8x16xf32>
    %16 = arith.select %9, %14, %15 : vector<2x8x16xi1>, vector<2x8x16xf32>
    %17 = vector.shape_cast %16 : vector<2x8x16xf32> to vector<1x2x8x16xf32>
    %cst_11 = arith.constant dense<0.000000e+00> : vector<1xf32>
    %18 = vector.multi_reduction <add>, %17, %cst_11 [1, 2, 3] : vector<1x2x8x16xf32> to vector<1xf32>
    %19 = vector.shape_cast %18 : vector<1xf32> to vector<1x1x1x1xf32>
    %20 = vector.extract %19[0, 0, 0, 0] : f32 from vector<1x1x1x1xf32>
    %21 = vector.broadcast %20 : f32 to vector<1x1x1xf32>
    %c0_12 = arith.constant 0 : index
    %c0_13 = arith.constant 0 : index
    %c0_14 = arith.constant 0 : index
    %22 = vector.load %arg8[%c0_12, %c0_13, %c0_14] : memref<1x1x1xf32, #tpu.memory_space<vmem>>, vector<1x1x1xf32>
    tpu.vector_store %arg8[%c0_12, %c0_13, %c0_14], %21 {strides = array<i32>} : memref<1x1x1xf32, #tpu.memory_space<vmem>>, vector<1x1x1xf32>,
    %c0_15 = arith.constant 0 : index
    %c0_16 = arith.constant 0 : index
    %23 = vector.load %arg6[%c0_15, %c0_16] : memref<2x16xf32, #tpu.memory_space<vmem>>, vector<2x16xf32>
    %c0_17 = arith.constant 0 : index
    %c0_18 = arith.constant 0 : index
    %24 = vector.load %arg7[%c0_17, %c0_18] : memref<2x16xf32, #tpu.memory_space<vmem>>, vector<2x16xf32>
    %25 = tpu.iota {dimensions = array<i32: 1>} : vector<2x16xi32>
    %26 = vector.broadcast %0 : i32 to vector<2x16xi32>
    %27 = arith.addi %25, %26 : vector<2x16xi32>
    %c0_19 = arith.constant 0 : index
    %c0_20 = arith.constant 0 : index
    %28 = vector.load %arg2[%c0_19, %c0_20] : memref<2x1xi32, #tpu.memory_space<vmem>>, vector<2x1xi32>
    %29 = vector.broadcast %28 : vector<2x1xi32> to vector<2x16xi32>
    %30 = arith.cmpi slt, %27, %29 : vector<2x16xi32>
    %cst_21 = arith.constant 0.000000e+00 : f32
    %31 = vector.broadcast %cst_21 : f32 to vector<2x16xf32>
    %32 = arith.subf %31, %23 : vector<2x16xf32>
    %cst_22 = arith.constant 0.000000e+00 : f32
    %33 = vector.broadcast %cst_22 : f32 to vector<2x16xf32>
    %34 = arith.maximumf %32, %33 : vector<2x16xf32>
    %35 = math.absf %23 : vector<2x16xf32>
    %cst_23 = arith.constant 0.000000e+00 : f32
    %36 = vector.broadcast %cst_23 : f32 to vector<2x16xf32>
    %37 = arith.subf %36, %35 : vector<2x16xf32>
    %38 = math.exp %37 : vector<2x16xf32>
    %cst_24 = arith.constant 1.000000e+00 : f32
    %39 = vector.broadcast %cst_24 : f32 to vector<2x16xf32>
    %40 = arith.addf %39, %38 : vector<2x16xf32>
    %41 = math.log %40 : vector<2x16xf32>
    %42 = arith.addf %34, %41 : vector<2x16xf32>
    %cst_25 = arith.constant 1.000000e+00 : f32
    %43 = vector.broadcast %cst_25 : f32 to vector<2x16xf32>
    %44 = arith.subf %43, %24 : vector<2x16xf32>
    %45 = arith.mulf %44, %23 : vector<2x16xf32>
    %46 = arith.addf %45, %42 : vector<2x16xf32>
    %cst_26 = arith.constant 0.000000e+00 : f32
    %47 = vector.broadcast %cst_26 : f32 to vector<2x16xf32>
    %48 = arith.select %30, %46, %47 : vector<2x16xi1>, vector<2x16xf32>
    %49 = vector.shape_cast %48 : vector<2x16xf32> to vector<1x2x16xf32>
    %cst_27 = arith.constant dense<0.000000e+00> : vector<1xf32>
    %50 = vector.multi_reduction <add>, %49, %cst_27 [1, 2] : vector<1x2x16xf32> to vector<1xf32>
    %51 = vector.shape_cast %50 : vector<1xf32> to vector<1x1x1xf32>
    %52 = vector.extract %51[0, 0, 0] : f32 from vector<1x1x1xf32>
    %53 = vector.broadcast %52 : f32 to vector<1x1x1xf32>
    %c0_28 = arith.constant 0 : index
    %c0_29 = arith.constant 0 : index
    %c0_30 = arith.constant 0 : index
    %54 = vector.load %arg9[%c0_28, %c0_29, %c0_30] : memref<1x1x1xf32, #tpu.memory_space<vmem>>, vector<1x1x1xf32>
    tpu.vector_store %arg9[%c0_28, %c0_29, %c0_30], %53 {strides = array<i32>} : memref<1x1x1xf32, #tpu.memory_space<vmem>>, vector<1x1x1xf32>,
    return
  }
  func.func @transform_0(%arg0: i32) -> (i32, i32, i32) {
    %c0_i32 = arith.constant 0 : i32
    %c0_i32_0 = arith.constant 0 : i32
    %c0_i32_1 = arith.constant 0 : i32
    %c0_i32_2 = arith.constant 0 : i32
    return %c0_i32, %c0_i32_0, %c0_i32_1 : i32, i32, i32
  }
  func.func @transform_1(%arg0: i32) -> (i32, i32) {
    %c0_i32 = arith.constant 0 : i32
    %c0_i32_0 = arith.constant 0 : i32
    %c0_i32_1 = arith.constant 0 : i32
    return %c0_i32, %c0_i32_0 : i32, i32
  }
  func.func @transform_2(%arg0: i32) -> (i32, i32, i32) {
    %c0_i32 = arith.constant 0 : i32
    %c0_i32_0 = arith.constant 0 : i32
    %c0_i32_1 = arith.constant 0 : i32
    return %c0_i32, %c0_i32_0, %arg0 : i32, i32, i32
  }
  func.func @transform_3(%arg0: i32) -> (i32, i32, i32) {
    %c0_i32 = arith.constant 0 : i32
    %c0_i32_0 = arith.constant 0 : i32
    %c0_i32_1 = arith.constant 0 : i32
    return %c0_i32, %c0_i32_0, %arg0 : i32, i32, i32
  }
  func.func @transform_4(%arg0: i32) -> (i32, i32, i32) {
    %c0_i32 = arith.constant 0 : i32
    %c0_i32_0 = arith.constant 0 : i32
    %c0_i32_1 = arith.constant 0 : i32
    return %c0_i32, %c0_i32_0, %arg0 : i32, i32, i32
  }
  func.func @transform_5(%arg0: i32) -> (i32, i32) {
    %c0_i32 = arith.constant 0 : i32
    %c0_i32_0 = arith.constant 0 : i32
    return %c0_i32, %arg0 : i32, i32
  }
  func.func @transform_6(%arg0: i32) -> (i32, i32) {
    %c0_i32 = arith.constant 0 : i32
    %c0_i32_0 = arith.constant 0 : i32
    return %c0_i32, %arg0 : i32, i32
  }
  func.func @transform_7(%arg0: i32) -> (i32, i32, i32) {
    %c0_i32 = arith.constant 0 : i32
    %c0_i32_0 = arith.constant 0 : i32
    %c0_i32_1 = arith.constant 0 : i32
    return %arg0, %c0_i32, %c0_i32_0 : i32, i32, i32
  }
  func.func @transform_8(%arg0: i32) -> (i32, i32, i32) {
    %c0_i32 = arith.constant 0 : i32
    %c0_i32_0 = arith.constant 0 : i32
    %c0_i32_1 = arith.constant 0 : i32
    return %arg0, %c0_i32, %c0_i32_0 : i32, i32, i32
  }
}

</mosaic_0001>

<llo_original>
// kernel: tpu_custom_call.1
$region0: #{tpu_custom_call.1}
  #allocation0 [shape = 'u32[]', space=smem, size = 0x4, offset = 0x4, fixed_abs, tag = 'smem constant byte address 0x4 - core index']
  #allocation1 [shape = 'u32[144,128]{1,0:T(1,128)}', space=vmem, size = 0x12000, scoped, tag = 'internal scratch']
  %s0 = inlined_call_operand.vmem [shape: s32[2,1,1], index: 0, kind: input, shape index: {}]
  %s1 = inlined_call_operand.vmem [shape: s32[2,1], index: 1, kind: input, shape index: {}]
  %s2 = inlined_call_operand.hbm [shape: f32[2,8,16], index: 2, kind: input, shape index: {}]
  %s3 = inlined_call_operand.vmem [shape: f32[2,8,16], index: 3, kind: input, shape index: {}]
  %s4 = inlined_call_operand.hbm [shape: f32[2,8,16], index: 4, kind: input, shape index: {}]
  %s5 = inlined_call_operand.vmem [shape: f32[2,16], index: 5, kind: input, shape index: {}]
  %s6 = inlined_call_operand.vmem [shape: f32[2,16], index: 6, kind: input, shape index: {}]
  %s7 = inlined_call_operand.hbm [shape: f32[1,1,1], index: 7, kind: output, shape index: {0}]
  %s8 = inlined_call_operand.hbm [shape: f32[1,1,1], index: 8, kind: output, shape index: {1}]
  %9 = xla_tuple %s7, %s8
  %s10 = sld [smem:[#allocation0]]
  $region54: #{tpu_custom_call.1} parent=0
    _
  %s12 = ssub.s32 1, %s10
  %s13 = scalar_select 0, %s12, %s10
  $region1: #{tpu_custom_call.1} parent=0
    #allocation2 [shape = 'u8[8192]{0}', space=vmem, size = 0x2000, scoped, tag = 'input window, operand 2, single buffered']
    #allocation3 [shape = 's32[1]{0}', space=sflag, size = 0x4, scoped, tag = 'scoped memory for tpu_custom_call.1']
    #allocation4 [shape = 's32[1]{0}', space=sflag, size = 0x4, scoped, tag = 'scoped memory for tpu_custom_call.1']
    #allocation5 [shape = 'u8[8192]{0}', space=vmem, size = 0x2000, scoped, tag = 'input window, operand 4, single buffered']
    #allocation6 [shape = 's32[1]{0}', space=sflag, size = 0x4, scoped, tag = 'scoped memory for tpu_custom_call.1']
    #allocation7 [shape = 'u8[512]{0}', space=vmem, size = 0x400, scoped, tag = 'output window, operand 0, single buffered']
    #allocation8 [shape = 'u8[512]{0}', space=vmem, size = 0x400, scoped, tag = 'output window, operand 1, single buffered']
    #allocation9 [shape = 's32[1]{0}', space=sflag, size = 0x4, scoped, tag = 'scoped memory for tpu_custom_call.1']
    %14 = vsyncpa [#allocation3], 0
    %15 = vsyncpa [#allocation6], 0
    %16 = vsyncpa [#allocation4], 0
    %17 = vsyncpa [#allocation9], 0
    // Predicated region
    $region2: #{tpu_custom_call.1} parent=1 // pred_check
      _
    $region3: #{tpu_custom_call.1} parent=1 // pred_check_branch
      %19 = sbr.rel (0) target = $region5
    $region4: #{tpu_custom_call.1} parent=1 // pred_region
      _
    $region5: #{tpu_custom_call.1} parent=1 // pred_fallthru
      _
    // Predicated region
    $region6: #{tpu_custom_call.1} parent=1 // pred_check
      _
    $region7: #{tpu_custom_call.1} parent=1 // pred_check_branch
      %21 = sbr.rel (0) target = $region9
    $region8: #{tpu_custom_call.1} parent=1 // pred_region
      _
    $region9: #{tpu_custom_call.1} parent=1 // pred_fallthru
      _
    // Predicated region
    $region10: #{tpu_custom_call.1} parent=1 // pred_check
      _
    $region11: #{tpu_custom_call.1} parent=1 // pred_check_branch
      %23 = sbr.rel (0) target = $region13
    $region12: #{tpu_custom_call.1} parent=1 // pred_region
      %s25 = ssub.s32 256, 256
      %26 = vsyncadd [#allocation3], %s25
      %s27 = sshll.u32 [#allocation2], 4
      %s28 = int_to_ptr.vmem [resolvable:$true] %s27
      %33 = dma.hbm_to_vmem [thread:$0]  %s2, 256, %s28, [#allocation3], 128, 128, 8
    $region13: #{tpu_custom_call.1} parent=1 // pred_fallthru
      _
    // Predicated region
    $region14: #{tpu_custom_call.1} parent=1 // pred_check
      _
    $region15: #{tpu_custom_call.1} parent=1 // pred_check_branch
      %35 = sbr.rel (0) target = $region17
    $region16: #{tpu_custom_call.1} parent=1 // pred_region
      _
    $region17: #{tpu_custom_call.1} parent=1 // pred_fallthru
      _
    // Predicated region
    $region18: #{tpu_custom_call.1} parent=1 // pred_check
      _
    $region19: #{tpu_custom_call.1} parent=1 // pred_check_branch
      %37 = sbr.rel (0) target = $region21
    $region20: #{tpu_custom_call.1} parent=1 // pred_region
      %s39 = ssub.s32 256, 256
      %40 = vsyncadd [#allocation6], %s39
      %s41 = sshll.u32 [#allocation5], 4
      %s42 = int_to_ptr.vmem [resolvable:$true] %s41
      %47 = dma.hbm_to_vmem [thread:$0]  %s4, 256, %s42, [#allocation6], 128, 128, 8
    $region21: #{tpu_custom_call.1} parent=1 // pred_fallthru
      _
    // Predicated region
    $region22: #{tpu_custom_call.1} parent=1 // pred_check
      _
    $region23: #{tpu_custom_call.1} parent=1 // pred_check_branch
      %49 = sbr.rel (0) target = $region25
    $region24: #{tpu_custom_call.1} parent=1 // pred_region
      _
    $region25: #{tpu_custom_call.1} parent=1 // pred_fallthru
      _
    // Predicated region
    $region26: #{tpu_custom_call.1} parent=1 // pred_check
      _
    $region27: #{tpu_custom_call.1} parent=1 // pred_check_branch
      %51 = sbr.rel (0) target = $region29
    $region28: #{tpu_custom_call.1} parent=1 // pred_region
      _
    $region29: #{tpu_custom_call.1} parent=1 // pred_fallthru
      _
    // Predicated region
    $region30: #{tpu_custom_call.1} parent=1 // pred_check
      _
    $region31: #{tpu_custom_call.1} parent=1 // pred_check_branch
      %53 = sbr.rel (0) target = $region33
    $region32: #{tpu_custom_call.1} parent=1 // pred_region
      %54 = dma.done [#allocation3], 256
    $region33: #{tpu_custom_call.1} parent=1 // pred_fallthru
      _
    // Predicated region
    $region34: #{tpu_custom_call.1} parent=1 // pred_check
      _
    $region35: #{tpu_custom_call.1} parent=1 // pred_check_branch
      %56 = sbr.rel (0) target = $region37
    $region36: #{tpu_custom_call.1} parent=1 // pred_region
      %57 = dma.done [#allocation6], 256
    $region37: #{tpu_custom_call.1} parent=1 // pred_fallthru
      _
    %s58 = smul.u32 0, 16
    %v59 = vld [vmem:[#allocation2] sm:$0xff]
    %v60 = vld [vmem:[#allocation2 + $0x8] sm:$0xff]
    %v61 = vld [vmem:[%s3] sm:$0xff]
    %v62 = vld [vmem:[%s3 + $0x8] sm:$0xff]
    %v63 = vld [vmem:[#allocation5] sm:$0xff]
    %v64 = vld [vmem:[#allocation5 + $0x8] sm:$0xff]
    %v65 = vlaneseq
    %v66 = vand.u32 %v65, 127
    %v67 = vstv %s58
    %v68 = vadd.s32 %v66, %v67
    %v69 = vld [vmem:[%s0] sm:$0x1]
    %v70 = vld [vmem:[%s0 + $0x1] sm:$0x1]
    %v71 = vlaneseq
    %v72 = vshrl.u32 %v71, 7
    %v73 = vsub.s32 0, %v72
    %v74 = vrot.slane %v69, %v73
    %v75 = vlaneseq
    %v76 = vshrl.u32 %v75, 7
    %v77 = vsub.s32 0, %v76
    %v78 = vrot.slane %v70, %v77
    %79 = vset.pattern.permute.xlu0 0
    %80 = vperm.xlu0 %79, %v74
    %v81 = vpop.permute.xlu0 %80
    %82 = vset.pattern.permute.xlu0 0
    %83 = vperm.xlu0 %82, %v78
    %v84 = vpop.permute.xlu0 %83
    %vm85 = vcmp.lt.s32.totalorder %v68, %v81
    %vm86 = vcmp.lt.s32.totalorder %v68, %v84
    %v87 = vsub.f32 %v59, %v63
    %v88 = vsub.f32 %v60, %v64
    %v89 = vsub.f32 %v61, %v63
    %v90 = vsub.f32 %v62, %v64
    %v91 = vmul.f32 %v87, %v87
    %v92 = vmul.f32 %v88, %v88
    %v93 = vmul.f32 %v89, %v89
    %v94 = vmul.f32 %v90, %v90
    %v95 = vadd.f32 %v91, %v93
    %v96 = vadd.f32 %v92, %v94
    %v97 = vsel %vm85, %v95, 0.0
    %v98 = vsel %vm86, %v96, 0.0
    %vm99 = vcmask 130048
    %v100 = vsel %vm99, %v97, 0.0
    %v101 = vsel %vm99, %v98, 0.0
    %v102 = vadd.f32 %v100, %v101
    %103 = vadd.xlane.f32.xlu0 %v102
    %v104 = vpop.xlane.xlu0 %103
    %v105 = vrot.slane %v104, 4
    %v106 = vadd.f32 %v104, %v105
    %v107 = vrot.slane %v106, 2
    %v108 = vadd.f32 %v106, %v107
    %v109 = vrot.slane %v108, 1
    %v110 = vadd.f32 %v108, %v109
    %s111 = vtos %v110
    %v112 = vstv %s111
    %vm113 = vcmask 0
    %114 = vst.msk [vmem:[#allocation7] sm:$0x1] %vm113, %v112
    %v115 = vld [vmem:[%s5] sm:$0x3]
    %v116 = vld [vmem:[%s6] sm:$0x3]
    %v117 = vld [vmem:[%s1] sm:$0x3]
    %118 = vset.pattern.permute.xlu0 0
    %119 = vperm.xlu0 %118, %v117
    %v120 = vpop.permute.xlu0 %119
    %vm121 = vcmp.lt.s32.totalorder %v68, %v120
    %v122 = vsub.f32 0.0, %v115
    %v123 = vmax.f32 %v122, 0.0
    %v124 = vand.u32 2147483647, %v115
    %v125 = vsub.f32 0.0, %v124
    %v126 = vmul.f32 %v125, 1.442695
    %v127 = vpow.pop %v126
    %v128 = vadd.f32 %v127, 1.0
    %v129 = vlog2.pop %v128
    %v130 = vmul.f32 %v129, 0.6931472
    %v131 = vadd.f32 %v123, %v130
    %v132 = vsub.f32 1.0, %v116
    %v133 = vmul.f32 %v132, %v115
    %v134 = vadd.f32 %v133, %v131
    %v135 = vsel %vm121, %v134, 0.0
    %vm136 = vcmask 123904
    %v137 = vsel %vm136, %v135, 0.0
    %138 = vadd.xlane.f32.xlu0 %v137
    %v139 = vpop.xlane.xlu0 %138
    %v140 = vrot.slane %v139, 4
    %v141 = vadd.f32 %v139, %v140
    %v142 = vrot.slane %v141, 2
    %v143 = vadd.f32 %v141, %v142
    %v144 = vrot.slane %v143, 1
    %v145 = vadd.f32 %v143, %v144
    %s146 = vtos %v145
    %v147 = vstv %s146
    %148 = vst.msk [vmem:[#allocation8] sm:$0x1] %vm113, %v147
    // Predicated region
    $region38: #{tpu_custom_call.1} parent=1 // pred_check
      _
    $region39: #{tpu_custom_call.1} parent=1 // pred_check_branch
      %150 = sbr.rel (0) target = $region41
    $region40: #{tpu_custom_call.1} parent=1 // pred_region
      %s152 = ssub.s32 16, 16
      %153 = vsyncadd [#allocation4], %s152
      %s155 = sshll.u32 [#allocation7], 4
      %s156 = int_to_ptr.vmem [resolvable:$true] %s155
      %158 = dma.vmem_to_hbm [thread:$0]  %s156, 16, %s7, [#allocation4]
    $region41: #{tpu_custom_call.1} parent=1 // pred_fallthru
      _
    // Predicated region
    $region42: #{tpu_custom_call.1} parent=1 // pred_check
      _
    $region43: #{tpu_custom_call.1} parent=1 // pred_check_branch
      %160 = sbr.rel (0) target = $region45
    $region44: #{tpu_custom_call.1} parent=1 // pred_region
      %s162 = ssub.s32 16, 16
      %163 = vsyncadd [#allocation9], %s162
      %s165 = sshll.u32 [#allocation8], 4
      %s166 = int_to_ptr.vmem [resolvable:$true] %s165
      %168 = dma.vmem_to_hbm [thread:$0]  %s166, 16, %s8, [#allocation9]
    $region45: #{tpu_custom_call.1} parent=1 // pred_fallthru
      _
    // Predicated region
    $region46: #{tpu_custom_call.1} parent=1 // pred_check
      _
    $region47: #{tpu_custom_call.1} parent=1 // pred_check_branch
      %170 = sbr.rel (0) target = $region49
    $region48: #{tpu_custom_call.1} parent=1 // pred_region
      %171 = dma.done [#allocation4], 16
    $region49: #{tpu_custom_call.1} parent=1 // pred_fallthru
      _
    // Predicated region
    $region50: #{tpu_custom_call.1} parent=1 // pred_check
      _
    $region51: #{tpu_custom_call.1} parent=1 // pred_check_branch
      %173 = sbr.rel (0) target = $region53
    $region52: #{tpu_custom_call.1} parent=1 // pred_region
      %174 = dma.done [#allocation9], 16
    $region53: #{tpu_custom_call.1} parent=1 // pred_fallthru
      _
    %175 = vsyncpa [#allocation3], 1
    %176 = vsyncpa [#allocation6], 1
    %177 = vsyncpa [#allocation4], 1
    %178 = vsyncpa [#allocation9], 1

</llo_original>
